<compile_context>
chip_gen: v5e
topology: v5e:2x2
jax: 0.10.0
libtpu: 0.0.40
codegen_flags: <defaults>
</compile_context>

<pallas_src>
import functools

import jax
import jax.numpy as jnp
from jax.experimental import pallas as pl
from jax.experimental.pallas import tpu as pltpu


def _round_up(v, m):
    return (v + m - 1) // m * m


# ---------------------------------------------------------------------------
# Kernel 1: fused per-(batch, channel) bias = MLP(c) + conv_bias   (runs once)
# ---------------------------------------------------------------------------
def _context_bias_kernel(c_ref, w1_ref, b1_ref, w2_ref, b2_ref, cb_ref, o_ref):
    # c: (B, ctx)  w1: (ctx, H)  b1: (1, H)  w2: (H, C_out)  b2/cb: (1, C_out)
    h = jnp.dot(c_ref[...], w1_ref[...], preferred_element_type=jnp.float32)
    h = jnp.maximum(h + b1_ref[...], 0.0)
    bias = jnp.dot(h, w2_ref[...], preferred_element_type=jnp.float32)
    o_ref[...] = (bias + b2_ref[...] + cb_ref[...]).astype(o_ref.dtype)


# ---------------------------------------------------------------------------
# Kernel 2: conv1d tile = one aligned load + one MXU matmul + bias add
# ---------------------------------------------------------------------------
def _conv1d_kernel(x_ref, w_ref, bias_ref, o_ref, xs_ref, *,
                   kernel_size, c_in, c_in_p):
    # x_ref   : (C_in, L)          raw row for this batch (pipelined DMA)
    # w_ref   : (TCO, K*C_in_p)    taps flattened k-major (col = k*C_in_p + i)
    # bias_ref: (TCO, 1)           per-(channel, batch) bias (conv + context)
    # o_ref   : (TCO, TL)          lane-dense output tile
    # xs_ref  : (K*C_in_p, L_x)    scratch: K lane-shifted copies of the row
    co = pl.program_id(1)
    li = pl.program_id(2)
    tl = o_ref.shape[-1]
    l_in = x_ref.shape[-1]

    # Once per batch: build the K shifted / channel-padded copies of the
    # resident row.  All later tiles read it with aligned loads only.
    @pl.when(jnp.logical_and(co == 0, li == 0))
    def _():
        xs_ref[...] = jnp.zeros_like(xs_ref)
        for k in range(kernel_size):
            xs_ref[pl.ds(k * c_in_p, c_in), pl.ds(0, l_in - k)] = \
                x_ref[:, pl.ds(k, l_in - k)]

    start = pl.multiple_of(li * tl, 128)
    patch = xs_ref[:, pl.ds(start, tl)]               # (K*C_in_p, TL), aligned
    acc = jnp.dot(w_ref[...], patch, preferred_element_type=jnp.float32)
    o_ref[...] = (acc + bias_ref[...]).astype(o_ref.dtype)


# ---------------------------------------------------------------------------
# Wrapper
# ---------------------------------------------------------------------------
def contextual_conv1d(x, conv_w, conv_b, c=None, w1=None, b1=None, w2=None,
                      b2=None, *, tile_l=2048):
    """x: (B, C_in, L), conv_w: (C_out, C_in, K) -> (B, C_out, L_out).

    Implements nn.Conv1d defaults (stride=1, padding=0, dilation=1, groups=1)
    plus the Linear->ReLU->Linear context bias when c is given.
    """
    # TODO(synk): non-default Conv1d kwargs (stride/padding/dilation/groups)
    #             and the h_dim=None / list-of-ints ContextProcessor variants
    #             are not implemented here.
    B, C_in, L = x.shape
    C_out, _, K = conv_w.shape
    L_out = L - K + 1
    assert L_out >= 1, "kernel_size larger than input length"

    isz = jnp.dtype(x.dtype).itemsize
    sub = max(8, 32 // isz)                 # dtype-aware sublane quantum

    # ---- per-(batch, channel) bias: conv bias (+ context MLP), once --------
    if c is not None:
        H = w1.shape[1]
        bias = pl.pallas_call(
            _context_bias_kernel,
            out_shape=jax.ShapeDtypeStruct((B, C_out), jnp.float32),
            in_specs=[pl.BlockSpec(memory_space=pltpu.MemorySpace.VMEM)] * 6,
            out_specs=pl.BlockSpec(memory_space=pltpu.MemorySpace.VMEM),
        )(c, w1, b1.reshape(1, H), w2, b2.reshape(1, C_out),
          conv_b.reshape(1, C_out))
    else:
        bias = jnp.broadcast_to(conv_b[None, :].astype(jnp.float32),
                                (B, C_out))

    # ---- tiling: lane-dense output always (TL multiple of 128) -------------
    tile_l = _round_up(tile_l, 128)
    TL = tile_l if L_out > tile_l else _round_up(L_out, 128)
    L_out_p = _round_up(L_out, TL)
    n_l = L_out_p // TL
    L_x = L_out_p + K - 1                   # scratch length (>= L)

    # C_out tiling (single tile for typical small channel counts).
    TCO = _round_up(C_out, sub) if C_out <= 256 else 256
    C_out_p = _round_up(C_out, TCO)
    n_co = C_out_p // TCO

    C_in_p = _round_up(C_in, sub)           # sublane-aligned k-blocks

    # ---- weights: flatten taps k-major (column k*C_in_p + i) ---------------
    w_flat = jnp.transpose(conv_w, (0, 2, 1))                 # (C_out, K, C_in)
    w_flat = jnp.pad(w_flat, ((0, C_out_p - C_out), (0, 0),
                              (0, C_in_p - C_in)))
    w_flat = w_flat.reshape(C_out_p, K * C_in_p).astype(x.dtype)
    # TODO(synk): optional bf16 cast of w_flat / scratch for v6e/v7x MXU.

    # Bias table as (B, C_out_p, 1) so the kernel block is a broadcast-ready
    # (TCO, 1) column (no in-kernel dynamic 1-lane slice).
    if C_out_p != C_out:
        bias = jnp.pad(bias, ((0, 0), (0, C_out_p - C_out)))
    bias3 = bias.reshape(B, C_out_p, 1)

    # ---- VMEM budget: from hardware info, never below the estimate ---------
    est = (2 * max(C_in, sub) * _round_up(L, 128) * isz       # x row (dbl buf)
           + K * C_in_p * _round_up(L_x, 128) * isz           # shift scratch
           + 2 * TCO * K * C_in_p * isz                       # weights block
           + 2 * TCO * 128 * 4                                # bias column
           + 2 * TCO * TL * isz)                              # output tile
    try:
        cap = int(getattr(pltpu.get_tpu_info(), "vmem_capacity_bytes", 0)) \
            or (64 << 20)
    except Exception:
        cap = 64 << 20
    budget = int(cap * 0.7)
    vmem_limit = min(max(min(2 * est, budget), 16 << 20, est + (2 << 20)), cap)
    # TODO(synk): for very large L the resident shifted row no longer fits
    #             VMEM (especially v7x's 64 MiB); switch x to halo-tiled
    #             (TL + K - 1) windows in that regime.

    cost = pl.CostEstimate(
        flops=2 * B * C_out * L_out * K * C_in,
        transcendentals=0,
        bytes_accessed=int(B * C_in * L * isz + B * C_out_p * L_out_p * isz
                           + C_out_p * K * C_in_p * isz + B * C_out_p * 4),
    )

    kernel = functools.partial(_conv1d_kernel, kernel_size=K,
                               c_in=C_in, c_in_p=C_in_p)
    out_p = pl.pallas_call(
        kernel,
        out_shape=jax.ShapeDtypeStruct((B, C_out_p, L_out_p), x.dtype),
        grid=(B, n_co, n_l),
        in_specs=[
            # Raw (C_in, L) row of x for the current batch; block index is
            # constant along (co, li) -> one DMA per batch, no HBM pad copy.
            pl.BlockSpec((None, C_in, L), lambda b, co, li: (b, 0, 0)),
            # Flattened conv weights for this C_out tile (resident).
            pl.BlockSpec((TCO, K * C_in_p), lambda b, co, li: (co, 0)),
            # (TCO, 1) bias column for this (batch, C_out tile).
            pl.BlockSpec((None, TCO, 1), lambda b, co, li: (b, co, 0)),
        ],
        out_specs=pl.BlockSpec((None, TCO, TL), lambda b, co, li: (b, co, li)),
        scratch_shapes=[pltpu.VMEM((K * C_in_p, L_x), x.dtype)],
        compiler_params=pltpu.CompilerParams(
            # co/li carry the per-batch scratch fill -> must stay sequential.
            dimension_semantics=("parallel", "arbitrary", "arbitrary"),
            vmem_limit_bytes=int(vmem_limit),
        ),
        cost_estimate=cost,
    )(x, w_flat, bias3)

    if C_out_p == C_out and L_out_p == L_out:
        return out_p
    return out_p[:, :C_out, :L_out]


# ---------------------------------------------------------------------------
# Plain-JAX reference
# ---------------------------------------------------------------------------
def _reference(x, conv_w, conv_b, c, w1, b1, w2, b2):
    out = jax.lax.conv_general_dilated(
        x, conv_w, window_strides=(1,), padding='VALID',
        dimension_numbers=('NCH', 'OIH', 'NCH'))
    out = out + conv_b[None, :, None]
    if c is not None:
        h = jnp.maximum(c @ w1 + b1, 0.0)
        bias = h @ w2 + b2
        out = out + bias[:, :, None]
    return out


def _run_case(seed, B, C_in, C_out, L, K, ctx_dim, h_dim, use_context=True,
              tile_l=2048):
    ks = jax.random.split(jax.random.PRNGKey(seed), 8)
    conv_w = jax.random.uniform(ks[0], (C_out, C_in, K), jnp.float32, -0.3, 0.3)
    conv_b = jax.random.uniform(ks[1], (C_out,), jnp.float32, -0.3, 0.3)
    w1 = jax.random.uniform(ks[2], (ctx_dim, h_dim), jnp.float32, -0.3, 0.3)
    b1 = jax.random.uniform(ks[3], (h_dim,), jnp.float32, -0.3, 0.3)
    w2 = jax.random.uniform(ks[4], (h_dim, C_out), jnp.float32, -0.3, 0.3)
    b2 = jax.random.uniform(ks[5], (C_out,), jnp.float32, -0.3, 0.3)
    x = jax.random.normal(ks[6], (B, C_in, L), jnp.float32)
    c = jax.random.normal(ks[7], (B, ctx_dim), jnp.float32) if use_context \
        else None

    if use_context:
        out = contextual_conv1d(x, conv_w, conv_b, c, w1, b1, w2, b2,
                                tile_l=tile_l)
    else:
        out = contextual_conv1d(x, conv_w, conv_b, tile_l=tile_l)
    out = jax.block_until_ready(out)
    ref = _reference(x, conv_w, conv_b, c, w1, b1, w2, b2)
    assert out.shape == (B, C_out, L - K + 1), out.shape
    err = jnp.max(jnp.abs(out - ref))
    assert jnp.allclose(out, ref, atol=1e-4, rtol=1e-4), \
        f"mismatch vs reference, max err {err}"


if __name__ == "__main__":
    # Small shapes consistent with the module (single lane-dense tile).
    _run_case(seed=0, B=2, C_in=4, C_out=8, L=16, K=3, ctx_dim=6, h_dim=32)
    # Multi-tile path (tile_l=256 -> 4 L-tiles) with padded L tail.
    _run_case(seed=1, B=2, C_in=4, C_out=8, L=1002, K=3, ctx_dim=6, h_dim=32,
              tile_l=256)
    # Sub-quantum channel counts (C_in=3 -> pad 8, C_out=5 -> pad 8), K=5.
    _run_case(seed=2, B=2, C_in=3, C_out=5, L=40, K=5, ctx_dim=4, h_dim=16)
    # No-context path (bias = conv bias only).
    _run_case(seed=3, B=2, C_in=4, C_out=8, L=16, K=3, ctx_dim=6, h_dim=32,
              use_context=False)
    print("KERNEL_OK")
</pallas_src>

<mosaic_0001>
module attributes {stable_mosaic.version = 11 : i64} {
  func.func @_context_bias_kernel(%arg0: memref<2x6xf32, #tpu.memory_space<vmem>>, %arg1: memref<6x32xf32, #tpu.memory_space<vmem>>, %arg2: memref<1x32xf32, #tpu.memory_space<vmem>>, %arg3: memref<32x8xf32, #tpu.memory_space<vmem>>, %arg4: memref<1x8xf32, #tpu.memory_space<vmem>>, %arg5: memref<1x8xf32, #tpu.memory_space<vmem>>, %arg6: memref<2x8xf32, #tpu.memory_space<vmem>>) attributes {dimension_semantics = [], scalar_prefetch = 0 : i64, scratch_operands = 0 : i64, tpu.core_type = #tpu.core_type<tc>} {
    %c0 = arith.constant 0 : index
    %c0_0 = arith.constant 0 : index
    %0 = vector.load %arg0[%c0, %c0_0] : memref<2x6xf32, #tpu.memory_space<vmem>>, vector<2x6xf32>
    %c0_1 = arith.constant 0 : index
    %c0_2 = arith.constant 0 : index
    %1 = vector.load %arg1[%c0_1, %c0_2] : memref<6x32xf32, #tpu.memory_space<vmem>>, vector<6x32xf32>
    %cst = arith.constant dense<0.000000e+00> : vector<2x32xf32>
    %2 = tpu.matmul %0, %1, %cst {dimension_numbers = #tpu.dot_dimension_numbers<[1], [0], [0], [1], [0, 0, 1, 1], [], []>} : vector<2x6xf32>, vector<6x32xf32>, vector<2x32xf32> -> vector<2x32xf32>
    %c0_3 = arith.constant 0 : index
    %c0_4 = arith.constant 0 : index
    %3 = vector.load %arg2[%c0_3, %c0_4] : memref<1x32xf32, #tpu.memory_space<vmem>>, vector<1x32xf32>
    %4 = vector.broadcast %3 : vector<1x32xf32> to vector<2x32xf32>
    %5 = arith.addf %2, %4 : vector<2x32xf32>
    %cst_5 = arith.constant 0.000000e+00 : f32
    %6 = vector.broadcast %cst_5 : f32 to vector<2x32xf32>
    %7 = arith.maximumf %5, %6 : vector<2x32xf32>
    %c0_6 = arith.constant 0 : index
    %c0_7 = arith.constant 0 : index
    %8 = vector.load %arg3[%c0_6, %c0_7] : memref<32x8xf32, #tpu.memory_space<vmem>>, vector<32x8xf32>
    %cst_8 = arith.constant dense<0.000000e+00> : vector<2x8xf32>
    %9 = tpu.matmul %7, %8, %cst_8 {dimension_numbers = #tpu.dot_dimension_numbers<[1], [0], [0], [1], [0, 0, 1, 1], [], []>} : vector<2x32xf32>, vector<32x8xf32>, vector<2x8xf32> -> vector<2x8xf32>
    %c0_9 = arith.constant 0 : index
    %c0_10 = arith.constant 0 : index
    %10 = vector.load %arg4[%c0_9, %c0_10] : memref<1x8xf32, #tpu.memory_space<vmem>>, vector<1x8xf32>
    %11 = vector.broadcast %10 : vector<1x8xf32> to vector<2x8xf32>
    %12 = arith.addf %9, %11 : vector<2x8xf32>
    %c0_11 = arith.constant 0 : index
    %c0_12 = arith.constant 0 : index
    %13 = vector.load %arg5[%c0_11, %c0_12] : memref<1x8xf32, #tpu.memory_space<vmem>>, vector<1x8xf32>
    %14 = vector.broadcast %13 : vector<1x8xf32> to vector<2x8xf32>
    %15 = arith.addf %12, %14 : vector<2x8xf32>
    %c0_13 = arith.constant 0 : index
    %c0_14 = arith.constant 0 : index
    %16 = vector.load %arg6[%c0_13, %c0_14] : memref<2x8xf32, #tpu.memory_space<vmem>>, vector<2x8xf32>
    tpu.vector_store %arg6[%c0_13, %c0_14], %15 {strides = array<i32>} : memref<2x8xf32, #tpu.memory_space<vmem>>, vector<2x8xf32>,
    return
  }
}

</mosaic_0001>

<llo_original>
// kernel: tpu_custom_call.1
$region0: #{tpu_custom_call.1}
  #allocation0 [shape = 'u32[]', space=smem, size = 0x4, offset = 0x4, fixed_abs, tag = 'smem constant byte address 0x4 - core index']
  #allocation1 [shape = 'u32[72,128]{1,0:T(1,128)}', space=vmem, size = 0x9000, scoped, tag = 'internal scratch']
  %s0 = inlined_call_operand.vmem [shape: f32[2,6], index: 0, kind: input, shape index: {}]
  %s1 = inlined_call_operand.vmem [shape: f32[6,32], index: 1, kind: input, shape index: {}]
  %s2 = inlined_call_operand.vmem [shape: f32[1,32], index: 2, kind: input, shape index: {}]
  %s3 = inlined_call_operand.vmem [shape: f32[32,8], index: 3, kind: input, shape index: {}]
  %s4 = inlined_call_operand.vmem [shape: f32[1,8], index: 4, kind: input, shape index: {}]
  %s5 = inlined_call_operand.vmem [shape: f32[1,8], index: 5, kind: input, shape index: {}]
  %s6 = inlined_call_operand.hbm [shape: f32[2,8], index: 6, kind: output, shape index: {}]
  %s7 = sld [smem:[#allocation0]]
  $region34: #{tpu_custom_call.1} parent=0
    _
  %s9 = ssub.s32 1, %s7
  %s10 = scalar_select 0, %s9, %s7
  $region1: #{tpu_custom_call.1} parent=0
    #allocation2 [shape = 'u8[1024]{0}', space=vmem, size = 0x400, scoped, tag = 'output window, operand 0, single buffered']
    #allocation3 [shape = 's32[1]{0}', space=sflag, size = 0x4, scoped, tag = 'scoped memory for tpu_custom_call.1']
    %11 = vsyncpa [#allocation3], 0
    // Predicated region
    $region2: #{tpu_custom_call.1} parent=1 // pred_check
      _
    $region3: #{tpu_custom_call.1} parent=1 // pred_check_branch
      %13 = sbr.rel (0) target = $region5
    $region4: #{tpu_custom_call.1} parent=1 // pred_region
      _
    $region5: #{tpu_custom_call.1} parent=1 // pred_fallthru
      _
    // Predicated region
    $region6: #{tpu_custom_call.1} parent=1 // pred_check
      _
    $region7: #{tpu_custom_call.1} parent=1 // pred_check_branch
      %15 = sbr.rel (0) target = $region9
    $region8: #{tpu_custom_call.1} parent=1 // pred_region
      _
    $region9: #{tpu_custom_call.1} parent=1 // pred_fallthru
      _
    // Predicated region
    $region10: #{tpu_custom_call.1} parent=1 // pred_check
      _
    $region11: #{tpu_custom_call.1} parent=1 // pred_check_branch
      %17 = sbr.rel (0) target = $region13
    $region12: #{tpu_custom_call.1} parent=1 // pred_region
      _
    $region13: #{tpu_custom_call.1} parent=1 // pred_fallthru
      _
    // Predicated region
    $region14: #{tpu_custom_call.1} parent=1 // pred_check
      _
    $region15: #{tpu_custom_call.1} parent=1 // pred_check_branch
      %19 = sbr.rel (0) target = $region17
    $region16: #{tpu_custom_call.1} parent=1 // pred_region
      _
    $region17: #{tpu_custom_call.1} parent=1 // pred_fallthru
      _
    // Predicated region
    $region18: #{tpu_custom_call.1} parent=1 // pred_check
      _
    $region19: #{tpu_custom_call.1} parent=1 // pred_check_branch
      %21 = sbr.rel (0) target = $region21
    $region20: #{tpu_custom_call.1} parent=1 // pred_region
      _
    $region21: #{tpu_custom_call.1} parent=1 // pred_fallthru
      _
    // Predicated region
    $region22: #{tpu_custom_call.1} parent=1 // pred_check
      _
    $region23: #{tpu_custom_call.1} parent=1 // pred_check_branch
      %23 = sbr.rel (0) target = $region25
    $region24: #{tpu_custom_call.1} parent=1 // pred_region
      _
    $region25: #{tpu_custom_call.1} parent=1 // pred_fallthru
      _
    %v24 = vld [vmem:[%s0] sm:$0x3]
    %v25 = vld [vmem:[%s1] sm:$0x3f]
    %v26 = vld [vmem:[%s2] sm:$0x1]
    %v28 = vperm.slane %v26, 0
    %vm30 = vcmask 48128
    %v32 = vsel %vm30, %v24, 0
    %vm34 = vcmask 1045504
    %v36 = vsel %vm34, %v25, 0
    %38 = vmatpush.msra.mxu0 0.0
    %39 = vmatpush.msra.mxu0 0.0
    %40 = vmatpush.msra.mxu0 0.0
    %41 = vmatpush.msra.mxu0 0.0
    %42 = vmatpush.msra.mxu0 0.0
    %43 = vmatpush.msra.mxu0 0.0
    %44 = vmatpush.msra.mxu0 0.0
    %45 = vmatpush.msra.mxu0 0.0
    %46 = vmatpush.msra.mxu0 0.0
    %47 = vmatpush.msra.mxu0 0.0
    %48 = vmatpush.msra.mxu0 0.0
    %49 = vmatpush.msra.mxu0 0.0
    %50 = vmatpush.msra.mxu0 0.0
    %51 = vmatpush.msra.mxu0 0.0
    %52 = vmatpush.msra.mxu0 0.0
    %53 = vmatpush.msra.mxu0 %v36
    %54 = vmatmul.f32.gmra.mxu0 %v32
    %v55 = vpop.f32.mrf.mxu0
    %v56 = vadd.f32 %v28, %v55
    %57 = vdwg.mxu0
    %v58 = vmax.f32 %v56, 0.0
    %v59 = vld [vmem:[%s3] sm:$0xff]
    %v60 = vld [vmem:[%s3 + $0x8] sm:$0xff]
    %v61 = vld [vmem:[%s3 + $0x10] sm:$0xff]
    %v62 = vld [vmem:[%s3 + $0x18] sm:$0xff]
    %v63 = vld [vmem:[%s4] sm:$0x1]
    %v65 = vperm.slane %v63, 0
    %vm67 = vcmask 261120
    %v69 = vsel %vm67, %v58, 0
    %71 = vmatpush.msra.mxu0 0.0
    %72 = vmatpush.msra.mxu0 0.0
    %73 = vmatpush.msra.mxu0 0.0
    %74 = vmatpush.msra.mxu0 0.0
    %75 = vmatpush.msra.mxu0 0.0
    %76 = vmatpush.msra.mxu0 0.0
    %77 = vmatpush.msra.mxu0 0.0
    %78 = vmatpush.msra.mxu0 0.0
    %79 = vmatpush.msra.mxu0 0.0
    %80 = vmatpush.msra.mxu0 0.0
    %81 = vmatpush.msra.mxu0 0.0
    %82 = vmatpush.msra.mxu0 0.0
    %83 = vmatpush.msra.mxu0 %v62
    %84 = vmatpush.msra.mxu0 %v61
    %85 = vmatpush.msra.mxu0 %v60
    %86 = vmatpush.msra.mxu0 %v59
    %87 = vmatmul.f32.gmra.mxu0 %v69
    %v88 = vpop.f32.mrf.mxu0
    %v89 = vadd.f32 %v65, %v88
    %90 = vdwg.mxu0
    %v91 = vld [vmem:[%s5] sm:$0x1]
    %v93 = vperm.slane %v91, 0
    %v95 = vadd.f32 %v89, %v93
    %vm96 = vcmask 58368
    %97 = vst.msk [vmem:[#allocation2] sm:$0x3] %vm96, %v95
    // Predicated region
    $region26: #{tpu_custom_call.1} parent=1 // pred_check
      _
    $region27: #{tpu_custom_call.1} parent=1 // pred_check_branch
      %99 = sbr.rel (0) target = $region29
    $region28: #{tpu_custom_call.1} parent=1 // pred_region
      %101 = vsyncadd [#allocation3], 0
      %s103 = sshll.u32 [#allocation2], 4
      %s104 = int_to_ptr.vmem [resolvable:$true] %s103
      %s105 = sshll.u32 %s6, 4
      %s106 = int_to_ptr.hbm [resolvable:$true] %s105
      %108 = dma.vmem_to_hbm [thread:$0]  %s104, 32, %s106, [#allocation3]
    $region29: #{tpu_custom_call.1} parent=1 // pred_fallthru
      _
    // Predicated region
    $region30: #{tpu_custom_call.1} parent=1 // pred_check
      _
    $region31: #{tpu_custom_call.1} parent=1 // pred_check_branch
      %110 = sbr.rel (0) target = $region33
    $region32: #{tpu_custom_call.1} parent=1 // pred_region
      %112 = dma.done [#allocation3], 32
    $region33: #{tpu_custom_call.1} parent=1 // pred_fallthru
      _
    %113 = vsyncpa [#allocation3], 1

</llo_original>
